<compile_context>
chip_gen: v7x
topology: tpu7x:2x2x1
jax: 0.10.0
libtpu: 0.0.40
codegen_flags: <defaults>
</compile_context>

<pallas_src>
import math

import jax
import jax.numpy as jnp
from jax import lax
from jax.experimental import pallas as pl
from jax.experimental.pallas import tpu as pltpu


def _round_up(a, b):
    return ((a + b - 1) // b) * b


def _gelu_exact(x):
    # nn.GELU() default = exact erf formulation.
    return 0.5 * x * (1.0 + lax.erf(x * (1.0 / math.sqrt(2.0))))


# ---------------------------------------------------------------------------
# Per-generation tuning
# ---------------------------------------------------------------------------
def _device_tuning():
    """Returns (tm_default, tn_default, vmem_limit_bytes) for the local TPU."""
    try:
        kind = jax.devices()[0].device_kind.lower()
    except Exception:
        kind = ""
    mib = 1024 * 1024
    if "v5" in kind:
        return 256, 512, 100 * mib
    if "v6" in kind:
        return 1024, 1024, 100 * mib
    if "7" in kind:
        return 512, 1024, 56 * mib      # leave headroom under the 64 MiB cap
    # Unknown backend: conservative config that fits every generation.
    return 256, 512, 48 * mib


def make_mlp_config(n_embed, n_hidden=None):
    H = 4 * n_embed if n_hidden is None else n_hidden
    tm_d, tn_d, vmem = _device_tuning()
    Cp = _round_up(n_embed, 128)                       # lane-dense output
    tn = max(128, min(tn_d, _round_up(H, 128)))        # H-chunk width
    Hp = _round_up(H, tn)
    return dict(C=n_embed, H=H, Cp=Cp, Hp=Hp, tn=tn,
                tm_default=tm_d, vmem_limit_bytes=vmem)


def prepare_mlp_params(w1, b1, w2, b2, cfg):
    """One-time pad + bf16 cast of the weights (hoisted out of the hot path).

    Weights are stored (in, out). Zero-padding is exact: padded x columns hit
    zero W1 rows, padded H columns give gelu(0)=0 into zero W2 rows, padded C
    output columns are sliced off by the caller.
    """
    C, H, Cp, Hp = cfg["C"], cfg["H"], cfg["Cp"], cfg["Hp"]
    w1p = jnp.pad(w1, ((0, Cp - C), (0, Hp - H))).astype(jnp.bfloat16)
    b1p = jnp.pad(b1, (0, Hp - H)).reshape(1, Hp).astype(jnp.float32)
    w2p = jnp.pad(w2, ((0, Hp - H), (0, Cp - C))).astype(jnp.bfloat16)
    b2p = jnp.pad(b2, (0, Cp - C)).reshape(1, Cp).astype(jnp.float32)
    return w1p, b1p, w2p, b2p


# ---------------------------------------------------------------------------
# Kernels
# ---------------------------------------------------------------------------
def mlp_resident_kernel(x_ref, w1_ref, b1_ref, w2_ref, b2_ref, o_ref):
    # Weights fully resident in VMEM (constant index_map -> DMA'd once).
    x_bf = x_ref[...].astype(jnp.bfloat16)
    h = jnp.dot(x_bf, w1_ref[...], preferred_element_type=jnp.float32)
    h = _gelu_exact(h + b1_ref[...])
    y = jnp.dot(h.astype(jnp.bfloat16), w2_ref[...],
                preferred_element_type=jnp.float32)
    o_ref[...] = (y + b2_ref[...]).astype(o_ref.dtype)


def mlp_chunked_kernel(x_ref, w1_ref, b1_ref, w2_ref, b2_ref, o_ref, acc_ref):
    # Grid = (M_tiles, H_chunks); H is the inner reduction ("arbitrary") axis
    # with a resident f32 accumulator.
    k = pl.program_id(1)

    @pl.when(k == 0)
    def _():
        acc_ref[...] = jnp.zeros_like(acc_ref)

    x_bf = x_ref[...].astype(jnp.bfloat16)
    h = jnp.dot(x_bf, w1_ref[...], preferred_element_type=jnp.float32)
    h = _gelu_exact(h + b1_ref[...])
    acc_ref[...] += jnp.dot(h.astype(jnp.bfloat16), w2_ref[...],
                            preferred_element_type=jnp.float32)

    @pl.when(k == pl.num_programs(1) - 1)
    def _():
        o_ref[...] = (acc_ref[...] + b2_ref[...]).astype(o_ref.dtype)


# ---------------------------------------------------------------------------
# Wrapper
# ---------------------------------------------------------------------------
def mlp_forward(x, prepared, cfg, *, tm=None, force_chunked=False):
    """x: [B, T, C] (any float dtype). Returns [B, T, C] in x.dtype."""
    B, T, C = x.shape
    assert C == cfg["C"], "config / input n_embed mismatch"
    w1p, b1p, w2p, b2p = prepared
    Cp, Hp, tn = cfg["Cp"], cfg["Hp"], cfg["tn"]
    vmem_limit = cfg["vmem_limit_bytes"]

    M = B * T
    out_dtype = x.dtype
    x_item = jnp.dtype(x.dtype).itemsize
    o_item = jnp.dtype(out_dtype).itemsize

    tm = cfg["tm_default"] if tm is None else tm
    tm = max(8, min(tm, _round_up(M, 8)))

    # --- resident-weights eligibility (conservative: every spec double-buffered)
    tm_res = min(tm, 256)   # weights aren't re-streamed -> big tm not needed
    w_bytes = 2 * (Cp * Hp * 2)                    # W1 + W2, bf16
    resident_bytes = (2 * w_bytes
                      + 2 * tm_res * Cp * x_item   # x tile
                      + 2 * tm_res * Cp * o_item   # out tile
                      + 6 * tm_res * Hp            # f32 + bf16 hidden temps
                      + 8 * (Hp + Cp))             # biases
    use_resident = (not force_chunked) and resident_bytes <= int(0.6 * vmem_limit)

    if use_resident:
        tm = tm_res
        tn_ = tn
    else:
        # Shrink tiles until the chunked working set fits the VMEM budget.
        tn_ = tn

        def chunked_bytes(tm_, tnn):
            return (2 * tm_ * Cp * x_item + 2 * tm_ * Cp * o_item
                    + tm_ * Cp * 4                       # acc scratch
                    + 4 * Cp * tnn * 2                   # W1 + W2 chunks (x2 buf)
                    + 6 * tm_ * tnn                      # hidden temps
                    + 8 * (tnn + Cp))
        budget = int(0.85 * vmem_limit)
        while chunked_bytes(tm, tn_) > budget and tm > 256:
            tm = max(256, tm // 2)
        while chunked_bytes(tm, tn_) > budget and tn_ > 256:
            tn_ = max(256, tn_ // 2)                     # Hp stays divisible

    # Ensure >=2 M tiles when possible so the parallel axis can shard across
    # both TensorCores on v7x / megacore.
    if _round_up(M, tm) // tm < 2 and M >= 16:
        tm = _round_up(-(-M // 2), 8)
    Mp = _round_up(M, tm)

    x2d = x.reshape(M, C)
    if (Mp, Cp) != (M, C):
        x2d = jnp.pad(x2d, ((0, Mp - M), (0, Cp - C)))

    compiler_params = pltpu.CompilerParams(
        dimension_semantics=(("parallel",) if use_resident
                             else ("parallel", "arbitrary")),
        vmem_limit_bytes=vmem_limit)

    if use_resident:
        out2d = pl.pallas_call(
            mlp_resident_kernel,
            out_shape=jax.ShapeDtypeStruct((Mp, Cp), out_dtype),
            grid_spec=pltpu.PrefetchScalarGridSpec(
                num_scalar_prefetch=0,
                grid=(Mp // tm,),
                in_specs=[
                    pl.BlockSpec((tm, Cp), lambda i: (i, 0)),   # x row tile
                    pl.BlockSpec((Cp, Hp), lambda i: (0, 0)),   # W1 (resident)
                    pl.BlockSpec((1, Hp), lambda i: (0, 0)),    # b1
                    pl.BlockSpec((Hp, Cp), lambda i: (0, 0)),   # W2 (resident)
                    pl.BlockSpec((1, Cp), lambda i: (0, 0)),    # b2
                ],
                out_specs=pl.BlockSpec((tm, Cp), lambda i: (i, 0)),
            ),
            compiler_params=compiler_params,
        )(x2d, w1p, b1p, w2p, b2p)
    else:
        # TODO(synk): on v7x with f32 outputs, VMEM could be trimmed further by
        # accumulating directly into o_ref and dropping the acc scratch.
        out2d = pl.pallas_call(
            mlp_chunked_kernel,
            out_shape=jax.ShapeDtypeStruct((Mp, Cp), out_dtype),
            grid_spec=pltpu.PrefetchScalarGridSpec(
                num_scalar_prefetch=0,
                grid=(Mp // tm, Hp // tn_),
                in_specs=[
                    pl.BlockSpec((tm, Cp), lambda i, k: (i, 0)),    # x row tile
                    pl.BlockSpec((Cp, tn_), lambda i, k: (0, k)),   # W1 H-chunk
                    pl.BlockSpec((1, tn_), lambda i, k: (0, k)),    # b1 H-chunk
                    pl.BlockSpec((tn_, Cp), lambda i, k: (k, 0)),   # W2 H-chunk
                    pl.BlockSpec((1, Cp), lambda i, k: (0, 0)),     # b2
                ],
                out_specs=pl.BlockSpec((tm, Cp), lambda i, k: (i, 0)),
                scratch_shapes=[pltpu.VMEM((tm, Cp), jnp.float32)],
            ),
            compiler_params=compiler_params,
        )(x2d, w1p, b1p, w2p, b2p)

    return out2d[:M, :C].reshape(B, T, C)


# ---------------------------------------------------------------------------
# Reference / init / test
# ---------------------------------------------------------------------------
def init_params(key, n_embed):
    """Mimics PyTorch nn.Linear default init (uniform +/- 1/sqrt(fan_in))."""
    h = 4 * n_embed
    k1, k2, k3, k4 = jax.random.split(key, 4)
    lim1 = 1.0 / math.sqrt(n_embed)
    lim2 = 1.0 / math.sqrt(h)
    # stored as (in, out) = transpose of PyTorch's (out, in)
    w1 = jax.random.uniform(k1, (n_embed, h), jnp.float32, -lim1, lim1)
    b1 = jax.random.uniform(k2, (h,), jnp.float32, -lim1, lim1)
    w2 = jax.random.uniform(k3, (h, n_embed), jnp.float32, -lim2, lim2)
    b2 = jax.random.uniform(k4, (n_embed,), jnp.float32, -lim2, lim2)
    return w1, b1, w2, b2


def mlp_reference(x, w1, b1, w2, b2):
    h = jnp.dot(x, w1) + b1
    h = _gelu_exact(h)
    return jnp.dot(h, w2) + b2


if __name__ == "__main__":
    B, T, n_embed = 2, 8, 32
    key = jax.random.PRNGKey(0)
    kx, kp = jax.random.split(key)
    x = jax.random.normal(kx, (B, T, n_embed), jnp.float32)
    w1, b1, w2, b2 = init_params(kp, n_embed)

    cfg = make_mlp_config(n_embed)
    prepared = prepare_mlp_params(w1, b1, w2, b2, cfg)   # one-time prep

    ref = mlp_reference(x, w1, b1, w2, b2)

    # Auto path (resident weights for this small model).
    out = jax.block_until_ready(mlp_forward(x, prepared, cfg))
    assert out.shape == (B, T, n_embed)
    # bf16 matmul operands with f32 accumulation -> loosened tolerance.
    assert jnp.allclose(out, ref, atol=5e-2, rtol=5e-2), "resident path mismatch"

    # Also exercise the chunked (large-model) path.
    out_c = jax.block_until_ready(mlp_forward(x, prepared, cfg, force_chunked=True))
    assert jnp.allclose(out_c, ref, atol=5e-2, rtol=5e-2), "chunked path mismatch"

    print("KERNEL_OK")
</pallas_src>

<mosaic_0001>
module attributes {stable_mosaic.version = 11 : i64} {
  func.func @mlp_resident_kernel(%arg0: i32, %arg1: memref<8x128xf32, #tpu.memory_space<vmem>>, %arg2: memref<128x128xbf16, #tpu.memory_space<vmem>>, %arg3: memref<1x128xf32, #tpu.memory_space<vmem>>, %arg4: memref<128x128xbf16, #tpu.memory_space<vmem>>, %arg5: memref<1x128xf32, #tpu.memory_space<vmem>>, %arg6: memref<8x128xf32, #tpu.memory_space<vmem>>) attributes {dimension_semantics = [#tpu.dimension_semantics<parallel>], iteration_bounds = array<i64: 2>, scalar_prefetch = 0 : i64, scratch_operands = 0 : i64, tpu.core_type = #tpu.core_type<tc>, window_params = [{transform_indices = @transform_0, window_bounds = array<i64: 8, 128>}, {pipeline_mode = #tpu.pipeline_mode<synchronous>, transform_indices = @transform_1, window_bounds = array<i64: 128, 128>}, {pipeline_mode = #tpu.pipeline_mode<synchronous>, transform_indices = @transform_2, window_bounds = array<i64: 1, 128>}, {pipeline_mode = #tpu.pipeline_mode<synchronous>, transform_indices = @transform_3, window_bounds = array<i64: 128, 128>}, {pipeline_mode = #tpu.pipeline_mode<synchronous>, transform_indices = @transform_4, window_bounds = array<i64: 1, 128>}, {transform_indices = @transform_5, window_bounds = array<i64: 8, 128>}]} {
    %c0 = arith.constant 0 : index
    %c0_0 = arith.constant 0 : index
    %0 = vector.load %arg1[%c0, %c0_0] : memref<8x128xf32, #tpu.memory_space<vmem>>, vector<8x128xf32>
    %1 = arith.truncf %0 : vector<8x128xf32> to vector<8x128xbf16>
    %c0_1 = arith.constant 0 : index
    %c0_2 = arith.constant 0 : index
    %2 = vector.load %arg2[%c0_1, %c0_2] : memref<128x128xbf16, #tpu.memory_space<vmem>>, vector<128x128xbf16>
    %cst = arith.constant dense<0.000000e+00> : vector<8x128xf32>
    %3 = tpu.matmul %1, %2, %cst {dimension_numbers = #tpu.dot_dimension_numbers<[1], [0], [0], [1], [0, 0, 1, 1], [], []>} : vector<8x128xbf16>, vector<128x128xbf16>, vector<8x128xf32> -> vector<8x128xf32>
    %c0_3 = arith.constant 0 : index
    %c0_4 = arith.constant 0 : index
    %4 = vector.load %arg3[%c0_3, %c0_4] : memref<1x128xf32, #tpu.memory_space<vmem>>, vector<1x128xf32>
    %5 = vector.broadcast %4 : vector<1x128xf32> to vector<8x128xf32>
    %6 = arith.addf %3, %5 : vector<8x128xf32>
    %cst_5 = arith.constant 5.000000e-01 : f32
    %7 = vector.broadcast %cst_5 : f32 to vector<8x128xf32>
    %8 = arith.mulf %7, %6 : vector<8x128xf32>
    %cst_6 = arith.constant 0.707106769 : f32
    %9 = vector.broadcast %cst_6 : f32 to vector<8x128xf32>
    %10 = arith.mulf %6, %9 : vector<8x128xf32>
    %11 = math.erf %10 : vector<8x128xf32>
    %cst_7 = arith.constant 1.000000e+00 : f32
    %12 = vector.broadcast %cst_7 : f32 to vector<8x128xf32>
    %13 = arith.addf %12, %11 : vector<8x128xf32>
    %14 = arith.mulf %8, %13 : vector<8x128xf32>
    %15 = arith.truncf %14 : vector<8x128xf32> to vector<8x128xbf16>
    %c0_8 = arith.constant 0 : index
    %c0_9 = arith.constant 0 : index
    %16 = vector.load %arg4[%c0_8, %c0_9] : memref<128x128xbf16, #tpu.memory_space<vmem>>, vector<128x128xbf16>
    %cst_10 = arith.constant dense<0.000000e+00> : vector<8x128xf32>
    %17 = tpu.matmul %15, %16, %cst_10 {dimension_numbers = #tpu.dot_dimension_numbers<[1], [0], [0], [1], [0, 0, 1, 1], [], []>} : vector<8x128xbf16>, vector<128x128xbf16>, vector<8x128xf32> -> vector<8x128xf32>
    %c0_11 = arith.constant 0 : index
    %c0_12 = arith.constant 0 : index
    %18 = vector.load %arg5[%c0_11, %c0_12] : memref<1x128xf32, #tpu.memory_space<vmem>>, vector<1x128xf32>
    %19 = vector.broadcast %18 : vector<1x128xf32> to vector<8x128xf32>
    %20 = arith.addf %17, %19 : vector<8x128xf32>
    %c0_13 = arith.constant 0 : index
    %c0_14 = arith.constant 0 : index
    %21 = vector.load %arg6[%c0_13, %c0_14] : memref<8x128xf32, #tpu.memory_space<vmem>>, vector<8x128xf32>
    tpu.vector_store %arg6[%c0_13, %c0_14], %20 {strides = array<i32>} : memref<8x128xf32, #tpu.memory_space<vmem>>, vector<8x128xf32>,
    return
  }
  func.func @transform_0(%arg0: i32) -> (i32, i32) {
    %c0_i32 = arith.constant 0 : i32
    %c0_i32_0 = arith.constant 0 : i32
    return %arg0, %c0_i32 : i32, i32
  }
  func.func @transform_1(%arg0: i32) -> (i32, i32) {
    %c0_i32 = arith.constant 0 : i32
    %c0_i32_0 = arith.constant 0 : i32
    %c0_i32_1 = arith.constant 0 : i32
    return %c0_i32, %c0_i32_0 : i32, i32
  }
  func.func @transform_2(%arg0: i32) -> (i32, i32) {
    %c0_i32 = arith.constant 0 : i32
    %c0_i32_0 = arith.constant 0 : i32
    %c0_i32_1 = arith.constant 0 : i32
    return %c0_i32, %c0_i32_0 : i32, i32
  }
  func.func @transform_3(%arg0: i32) -> (i32, i32) {
    %c0_i32 = arith.constant 0 : i32
    %c0_i32_0 = arith.constant 0 : i32
    %c0_i32_1 = arith.constant 0 : i32
    return %c0_i32, %c0_i32_0 : i32, i32
  }
  func.func @transform_4(%arg0: i32) -> (i32, i32) {
    %c0_i32 = arith.constant 0 : i32
    %c0_i32_0 = arith.constant 0 : i32
    %c0_i32_1 = arith.constant 0 : i32
    return %c0_i32, %c0_i32_0 : i32, i32
  }
  func.func @transform_5(%arg0: i32) -> (i32, i32) {
    %c0_i32 = arith.constant 0 : i32
    %c0_i32_0 = arith.constant 0 : i32
    return %arg0, %c0_i32 : i32, i32
  }
}

</mosaic_0001>

<llo_original>
// kernel: tpu_custom_call.1
$region0: #{tpu_custom_call.1}
  #allocation0 [shape = 'u32[]', space=smem, size = 0x4, offset = 0x4, fixed_abs, tag = 'smem constant byte address 0x4 - core index']
  #allocation1 [shape = 'u32[144,128]{1,0:T(1,128)}', space=vmem, size = 0x12000, scoped, tag = 'internal scratch']
  %s0 = inlined_call_operand.hbm [shape: f32[16,128], index: 0, kind: input, shape index: {}]
  %s1 = inlined_call_operand.hbm [shape: bf16[128,128], index: 1, kind: input, shape index: {}]
  %s2 = inlined_call_operand.vmem [shape: f32[1,128], index: 2, kind: input, shape index: {}]
  %s3 = inlined_call_operand.hbm [shape: bf16[128,128], index: 3, kind: input, shape index: {}]
  %s4 = inlined_call_operand.vmem [shape: f32[1,128], index: 4, kind: input, shape index: {}]
  %s5 = inlined_call_operand.hbm [shape: f32[16,128], index: 5, kind: output, shape index: {}]
  %s6 = sld [smem:[#allocation0]]
  $region65: #{tpu_custom_call.1} parent=0
    _
  %s8 = ssub.s32 1, %s6
  %s9 = scalar_select 0, %s8, %s6
  $region1: #{tpu_custom_call.1} parent=0
    #allocation2 [shape = 'u8[8192]{0}', space=vmem, size = 0x2000, scoped, tag = 'input window, operand 0']
    #allocation3 [shape = 's32[2]{0}', space=sflag, size = 0x8, scoped, tag = 'scoped memory for tpu_custom_call.1']
    #allocation4 [shape = 's32[2]{0}', space=sflag, size = 0x8, scoped, tag = 'scoped memory for tpu_custom_call.1']
    #allocation5 [shape = 'u8[32768]{0}', space=vmem, size = 0x8000, scoped, tag = 'input window, operand 1, single buffered']
    #allocation6 [shape = 's32[1]{0}', space=sflag, size = 0x4, scoped, tag = 'scoped memory for tpu_custom_call.1']
    #allocation7 [shape = 'u8[32768]{0}', space=vmem, size = 0x8000, scoped, tag = 'input window, operand 3, single buffered']
    #allocation8 [shape = 'u8[8192]{0}', space=vmem, size = 0x2000, scoped, tag = 'output window, operand 0']
    %10 = vsyncpa [#allocation3], 0
    %s11 = scalar_lea.sflag [#allocation3], 1
    %12 = vsyncpa %s11, 0
    %13 = vsyncpa [#allocation6], 0
    %14 = vsyncpa [#allocation4], 0
    %s15 = scalar_lea.sflag [#allocation4], 1
    %16 = vsyncpa %s15, 0
    loop: start=0, step=1, limit=4
    $region2: #{tpu_custom_call.1} parent=1 // loop_pre_header
      _
    $region3: #{tpu_custom_call.1} parent=1 // loop_header
      %s18 = sphi 0, %s22
      %p19 = scmp.ge.s32.totalorder %s18, 4
      %s28 = sphi 0, %s30
      %s31 = sphi 0, %s28
      %s32 = sphi 0, %s31
      %s48 = sphi 0, %s32
      %s52 = sphi 0, %s52
      %s54 = sphi 0, %s52
      %s55 = sphi 0, %s54
      %s69 = sphi 0, %s55
      %s73 = sphi 0, %s73
      %s75 = sphi 0, %s73
      %s76 = sphi 0, %s75
      %s90 = sphi 0, %s76
      %s94 = sphi 0, %s94
      %s96 = sphi 0, %s94
      %s97 = sphi 0, %s96
      %s111 = sphi 0, %s97
      %s115 = sphi 0, %s115
      %s117 = sphi 0, %s115
      %s118 = sphi 0, %s117
      %s132 = sphi 0, %s118
      %s138 = sphi 0, %s140
      %s141 = sphi 0, %s138
      %s142 = sphi 0, %s141
      %s158 = sphi 0, %s142
    $region4: #{tpu_custom_call.1} parent=1 // loop_header_branch
      %21 = sbr.rel (%p19) target = $region8
    $region5: #{tpu_custom_call.1} parent=1 // loop_body
      %s23 = ssub.s32 %s18, 1
      %s24 = ssub.s32 %s18, 2
      %s25 = sadd.s32 %s18, 1
      %s26 = ssub.s32 %s18, %s25
      %p27 = scmp.eq.s32.totalorder %s26, 0
      %s29 = sadd.s32 %s28, 1
      %s30 = scalar_select %p27, %s28, %s29
      %p33 = pneg %p27
      %p34 = scmp.eq.s32.totalorder %s18, 1
      %p35 = por %p33, %p34
      %p36 = scmp.ne.s32.totalorder %s28, %s31
      %p37 = scmp.eq.s32.totalorder %s18, 0
      %p38 = por %p36, %p37
      %p39 = scmp.ne.s32.totalorder %s28, %s31
      %p40 = scmp.eq.s32.totalorder %s23, 1
      %p41 = por %p39, %p40
      %p42 = scmp.ne.s32.totalorder %s31, %s32
      %p43 = scmp.eq.s32.totalorder %s23, 0
      %p44 = por %p42, %p43
      %p45 = scmp.ne.s32.totalorder %s31, %s32
      %p46 = scmp.eq.s32.totalorder %s24, 1
      %p47 = por %p45, %p46
      %p49 = scmp.ne.s32.totalorder %s32, %s48
      %p50 = scmp.eq.s32.totalorder %s24, 0
      %p51 = por %p49, %p50
      %s53 = sadd.s32 %s52, 1
      %p56 = scmp.eq.s32.totalorder %s18, 1
      %p57 = scmp.ne.s32.totalorder %s52, %s54
      %p58 = scmp.eq.s32.totalorder %s18, 0
      %p59 = por %p57, %p58
      %p60 = scmp.ne.s32.totalorder %s52, %s54
      %p61 = scmp.eq.s32.totalorder %s23, 1
      %p62 = por %p60, %p61
      %p63 = scmp.ne.s32.totalorder %s54, %s55
      %p64 = scmp.eq.s32.totalorder %s23, 0
      %p65 = por %p63, %p64
      %p66 = scmp.ne.s32.totalorder %s54, %s55
      %p67 = scmp.eq.s32.totalorder %s24, 1
      %p68 = por %p66, %p67
      %p70 = scmp.ne.s32.totalorder %s55, %s69
      %p71 = scmp.eq.s32.totalorder %s24, 0
      %p72 = por %p70, %p71
      %s74 = sadd.s32 %s73, 1
      %p77 = scmp.eq.s32.totalorder %s18, 1
      %p78 = scmp.ne.s32.totalorder %s73, %s75
      %p79 = scmp.eq.s32.totalorder %s18, 0
      %p80 = por %p78, %p79
      %p81 = scmp.ne.s32.totalorder %s73, %s75
      %p82 = scmp.eq.s32.totalorder %s23, 1
      %p83 = por %p81, %p82
      %p84 = scmp.ne.s32.totalorder %s75, %s76
      %p85 = scmp.eq.s32.totalorder %s23, 0
      %p86 = por %p84, %p85
      %p87 = scmp.ne.s32.totalorder %s75, %s76
      %p88 = scmp.eq.s32.totalorder %s24, 1
      %p89 = por %p87, %p88
      %p91 = scmp.ne.s32.totalorder %s76, %s90
      %p92 = scmp.eq.s32.totalorder %s24, 0
      %p93 = por %p91, %p92
      %s95 = sadd.s32 %s94, 1
      %p98 = scmp.eq.s32.totalorder %s18, 1
      %p99 = scmp.ne.s32.totalorder %s94, %s96
      %p100 = scmp.eq.s32.totalorder %s18, 0
      %p101 = por %p99, %p100
      %p102 = scmp.ne.s32.totalorder %s94, %s96
      %p103 = scmp.eq.s32.totalorder %s23, 1
      %p104 = por %p102, %p103
      %p105 = scmp.ne.s32.totalorder %s96, %s97
      %p106 = scmp.eq.s32.totalorder %s23, 0
      %p107 = por %p105, %p106
      %p108 = scmp.ne.s32.totalorder %s96, %s97
      %p109 = scmp.eq.s32.totalorder %s24, 1
      %p110 = por %p108, %p109
      %p112 = scmp.ne.s32.totalorder %s97, %s111
      %p113 = scmp.eq.s32.totalorder %s24, 0
      %p114 = por %p112, %p113
      %s116 = sadd.s32 %s115, 1
      %p119 = scmp.eq.s32.totalorder %s18, 1
      %p120 = scmp.ne.s32.totalorder %s115, %s117
      %p121 = scmp.eq.s32.totalorder %s18, 0
      %p122 = por %p120, %p121
      %p123 = scmp.ne.s32.totalorder %s115, %s117
      %p124 = scmp.eq.s32.totalorder %s23, 1
      %p125 = por %p123, %p124
      %p126 = scmp.ne.s32.totalorder %s117, %s118
      %p127 = scmp.eq.s32.totalorder %s23, 0
      %p128 = por %p126, %p127
      %p129 = scmp.ne.s32.totalorder %s117, %s118
      %p130 = scmp.eq.s32.totalorder %s24, 1
      %p131 = por %p129, %p130
      %p133 = scmp.ne.s32.totalorder %s118, %s132
      %p134 = scmp.eq.s32.totalorder %s24, 0
      %p135 = por %p133, %p134
      %s136 = ssub.s32 %s18, %s25
      %p137 = scmp.eq.s32.totalorder %s136, 0
      %s139 = sadd.s32 %s138, 1
      %s140 = scalar_select %p137, %s138, %s139
      %p143 = pneg %p137
      %p144 = scmp.eq.s32.totalorder %s18, 1
      %p145 = por %p143, %p144
      %p146 = scmp.ne.s32.totalorder %s138, %s141
      %p147 = scmp.eq.s32.totalorder %s18, 0
      %p148 = por %p146, %p147
      %p149 = scmp.ne.s32.totalorder %s138, %s141
      %p150 = scmp.eq.s32.totalorder %s23, 1
      %p151 = por %p149, %p150
      %p152 = scmp.ne.s32.totalorder %s141, %s142
      %p153 = scmp.eq.s32.totalorder %s23, 0
      %p154 = por %p152, %p153
      %p155 = scmp.ne.s32.totalorder %s141, %s142
      %p156 = scmp.eq.s32.totalorder %s24, 1
      %p157 = por %p155, %p156
      %p159 = scmp.ne.s32.totalorder %s142, %s158
      %p160 = scmp.eq.s32.totalorder %s24, 0
      %p161 = por %p159, %p160
      %p162 = scmp.le.s32.totalorder 1, %s18
      %p163 = scmp.lt.s32.totalorder %s18, 3
      %p164 = pnand %p162, %p163
      %p165 = pneg %p164
      // Predicated region
      $region9: #{tpu_custom_call.1} parent=5 // pred_check
        _
      $region10: #{tpu_custom_call.1} parent=5 // pred_check_branch
        %167 = sbr.rel (%p164) target = $region12
      $region11: #{tpu_custom_call.1} parent=5 // pred_region
        %s168 = ssub.s32 %s18, 1
        // Predicated region
        $region13: #{tpu_custom_call.1} parent=11 // pred_check
          %p169 = pneg %p65
        $region14: #{tpu_custom_call.1} parent=11 // pred_check_branch
          %171 = sbr.rel (%p169) target = $region16
        $region15: #{tpu_custom_call.1} parent=11 // pred_region
          %s173 = ssub.s32 1024, 1024
          %174 = vsyncadd [#allocation6], %s173
          %s175 = sshll.u32 [#allocation5], 4
          %s176 = int_to_ptr.vmem [resolvable:$true] %s175
          %181 = dma.hbm_to_vmem [thread:$0]  %s1, 1024, %s176, [#allocation6], 64, 64, 4
        $region16: #{tpu_custom_call.1} parent=11 // pred_fallthru
          _
        // Predicated region
        $region17: #{tpu_custom_call.1} parent=11 // pred_check
          %p182 = pneg %p86
        $region18: #{tpu_custom_call.1} parent=11 // pred_check_branch
          %184 = sbr.rel (%p182) target = $region20
        $region19: #{tpu_custom_call.1} parent=11 // pred_region
          _
        $region20: #{tpu_custom_call.1} parent=11 // pred_fallthru
          _
        // Predicated region
        $region21: #{tpu_custom_call.1} parent=11 // pred_check
          %p185 = pneg %p107
        $region22: #{tpu_custom_call.1} parent=11 // pred_check_branch
          %187 = sbr.rel (%p185) target = $region24
        $region23: #{tpu_custom_call.1} parent=11 // pred_region
          %s189 = ssub.s32 1024, 1024
          %190 = vsyncadd [#allocation6], %s189
          %s191 = sshll.u32 [#allocation7], 4
          %s192 = int_to_ptr.vmem [resolvable:$true] %s191
          %197 = dma.hbm_to_vmem [thread:$0]  %s3, 1024, %s192, [#allocation6], 64, 64, 4
        $region24: #{tpu_custom_call.1} parent=11 // pred_fallthru
          _
        // Predicated region
        $region25: #{tpu_custom_call.1} parent=11 // pred_check
          %p198 = pneg %p128
        $region26: #{tpu_custom_call.1} parent=11 // pred_check_branch
          %200 = sbr.rel (%p198) target = $region28
        $region27: #{tpu_custom_call.1} parent=11 // pred_region
          _
        $region28: #{tpu_custom_call.1} parent=11 // pred_fallthru
          _
      $region12: #{tpu_custom_call.1} parent=5 // pred_fallthru
        _
      %p201 = scmp.lt.s32.totalorder %s18, 2
      // Predicated region
      $region29: #{tpu_custom_call.1} parent=5 // pred_check
        %p202 = pneg %p201
      $region30: #{tpu_custom_call.1} parent=5 // pred_check_branch
        %204 = sbr.rel (%p202) target = $region32
      $region31: #{tpu_custom_call.1} parent=5 // pred_region
        // Predicated region
        $region33: #{tpu_custom_call.1} parent=31 // pred_check
          %p205 = pneg %p38
        $region34: #{tpu_custom_call.1} parent=31 // pred_check_branch
          %207 = sbr.rel (%p205) target = $region36
        $region35: #{tpu_custom_call.1} parent=31 // pred_region
          %s208 = sand.u32 %s28, 1
          %s209 = scalar_lea.sflag [#allocation3], %s208
          %s210 = sand.u32 %s28, 1
          %s211 = smul.addr %s210, 8
          %s212 = scalar_lea.vmem [#allocation2], %s211
          %s214 = ssub.s32 128, 128
          %215 = vsyncadd %s209, %s214
          %s216 = smul.addr %s18, 128
          %s217 = scalar_lea.hbm %s0, %s216
          %s219 = sshll.u32 %s212, 4
          %s220 = int_to_ptr.vmem [resolvable:$true] %s219
          %222 = dma.hbm_to_vmem [thread:$0]  %s217, 128, %s220, %s209
        $region36: #{tpu_custom_call.1} parent=31 // pred_fallthru
          _
      $region32: #{tpu_custom_call.1} parent=5 // pred_fallthru
        _
      %p223 = scmp.le.s32.totalorder 1, %s18
      %p224 = scmp.lt.s32.totalorder %s18, 3
      %p225 = pnand %p223, %p224
      %p226 = pneg %p225
      // Predicated region
      $region37: #{tpu_custom_call.1} parent=5 // pred_check
        _
      $region38: #{tpu_custom_call.1} parent=5 // pred_check_branch
        %228 = sbr.rel (%p225) target = $region40
      $region39: #{tpu_custom_call.1} parent=5 // pred_region
        %s229 = ssub.s32 %s18, 1
        %s230 = sand.u32 %s31, 1
        %s231 = scalar_lea.sflag [#allocation3], %s230
        %s232 = sand.u32 %s31, 1
        %s233 = smul.addr %s232, 8
        %s234 = scalar_lea.vmem [#allocation2], %s233
        // Predicated region
        $region41: #{tpu_custom_call.1} parent=39 // pred_check
          %p235 = pneg %p44
        $region42: #{tpu_custom_call.1} parent=39 // pred_check_branch
          %237 = sbr.rel (%p235) target = $region44
        $region43: #{tpu_custom_call.1} parent=39 // pred_region
          %238 = dma.done %s231, 128
        $region44: #{tpu_custom_call.1} parent=39 // pred_fallthru
          _
        // Predicated region
        $region45: #{tpu_custom_call.1} parent=39 // pred_check
          %p239 = pneg %p65
        $region46: #{tpu_custom_call.1} parent=39 // pred_check_branch
          %241 = sbr.rel (%p239) target = $region48
        $region47: #{tpu_custom_call.1} parent=39 // pred_region
          %242 = dma.done [#allocation6], 1024
        $region48: #{tpu_custom_call.1} parent=39 // pred_fallthru
          _
        // Predicated region
        $region49: #{tpu_custom_call.1} parent=39 // pred_check
          %p243 = pneg %p107
        $region50: #{tpu_custom_call.1} parent=39 // pred_check_branch
          %245 = sbr.rel (%p243) target = $region52
        $region51: #{tpu_custom_call.1} parent=39 // pred_region
          %246 = dma.done [#allocation6], 1024
        $region52: #{tpu_custom_call.1} parent=39 // pred_fallthru
          _
        %s247 = sand.u32 %s31, 1
        %s248 = scalar_lea.sflag [#allocation3], %s247
        %s249 = sand.u32 %s31, 1
        %s250 = smul.addr %s249, 8
        %s251 = scalar_lea.vmem [#allocation2], %s250
        %p252 = pneg %p44
        %p253 = pneg %p41
        %p254 = pneg %p65
        %p255 = pneg %p62
        %p256 = pneg %p86
        %p257 = pneg %p83
        %p258 = pneg %p107
        %p259 = pneg %p104
        %p260 = pneg %p128
        %p261 = pneg %p125
        %p262 = pneg %p154
        %p263 = pneg %p151
        %s264 = sand.u32 %s141, 1
        %s265 = scalar_lea.sflag [#allocation4], %s264
        %s266 = sand.u32 %s141, 1
        %s267 = smul.addr %s266, 8
        %s268 = scalar_lea.vmem [#allocation8], %s267
        %v270 = vld [vmem:[%s234] sm:$0xff]
        %v271 = vpack.c.bf16 %v270, %v270
        %v272 = vld [vmem:[#allocation5] sm:$0xf]
        %v273 = vld [vmem:[#allocation5 + $0x4] sm:$0xf]
        %v274 = vld [vmem:[#allocation5 + $0x8] sm:$0xf]
        %v275 = vld [vmem:[#allocation5 + $0xc] sm:$0xf]
        %v276 = vld [vmem:[#allocation5 + $0x10] sm:$0xf]
        %v277 = vld [vmem:[#allocation5 + $0x14] sm:$0xf]
        %v278 = vld [vmem:[#allocation5 + $0x18] sm:$0xf]
        %v279 = vld [vmem:[#allocation5 + $0x1c] sm:$0xf]
        %v280 = vld [vmem:[#allocation5 + $0x20] sm:$0xf]
        %v281 = vld [vmem:[#allocation5 + $0x24] sm:$0xf]
        %v282 = vld [vmem:[#allocation5 + $0x28] sm:$0xf]
        %v283 = vld [vmem:[#allocation5 + $0x2c] sm:$0xf]
        %v284 = vld [vmem:[#allocation5 + $0x30] sm:$0xf]
        %v285 = vld [vmem:[#allocation5 + $0x34] sm:$0xf]
        %v286 = vld [vmem:[#allocation5 + $0x38] sm:$0xf]
        %v287 = vld [vmem:[#allocation5 + $0x3c] sm:$0xf]
        %v288 = vld [vmem:[%s2] sm:$0x1]
        %v290 = vlaneseq
        %v291 = vshrl.u32 %v290, 7
        %v292 = vsub.s32 0, %v291
        %v293 = vrot.slane %v288, %v292
        %v311 = vunpack.c.l.b16 %v272
        %v312 = vunpack.c.l.b16 %v273
        %v313 = vunpack.c.l.b16 %v274
        %v314 = vunpack.c.l.b16 %v275
        %v315 = vunpack.c.l.b16 %v276
        %v316 = vunpack.c.l.b16 %v277
        %v317 = vunpack.c.l.b16 %v278
        %v318 = vunpack.c.l.b16 %v279
        %v319 = vunpack.c.l.b16 %v280
        %v320 = vunpack.c.l.b16 %v281
        %v321 = vunpack.c.l.b16 %v282
        %v322 = vunpack.c.l.b16 %v283
        %v323 = vunpack.c.l.b16 %v284
        %v324 = vunpack.c.l.b16 %v285
        %v325 = vunpack.c.l.b16 %v286
        %v326 = vunpack.c.l.b16 %v287
        %v327 = vpack.c.b16 %v312, %v311
        %v328 = vpack.c.b16 %v314, %v313
        %v329 = vpack.c.b16 %v316, %v315
        %v330 = vpack.c.b16 %v318, %v317
        %v331 = vpack.c.b16 %v320, %v319
        %v332 = vpack.c.b16 %v322, %v321
        %v333 = vpack.c.b16 %v324, %v323
        %v334 = vpack.c.b16 %v326, %v325
        %343 = vmatprep.subr.bf16.mxu0 0
        %344 = vmatpush1.bf16.msra.mxu0 %v327
        %345 = vmatprep.subr.bf16.mxu0 0
        %346 = vmatpush1.bf16.msra.mxu0 %v328
        %347 = vmatprep.subr.bf16.mxu0 0
        %348 = vmatpush1.bf16.msra.mxu0 %v329
        %349 = vmatprep.subr.bf16.mxu0 0
        %350 = vmatpush1.bf16.msra.mxu0 %v330
        %351 = vmatprep.subr.bf16.mxu0 0
        %352 = vmatpush1.bf16.msra.mxu0 %v331
        %353 = vmatprep.subr.bf16.mxu0 0
        %354 = vmatpush1.bf16.msra.mxu0 %v332
        %355 = vmatprep.subr.bf16.mxu0 0
        %356 = vmatpush1.bf16.msra.mxu0 %v333
        %357 = vmatprep.subr.bf16.mxu0 0
        %358 = vmatpush1.bf16.msra.mxu0 %v334
        %359 = vmatprep.subr.bf16.mxu0 0
        %360 = vmatpush1.bf16.msra.mxu0 0
        %361 = vmatprep.subr.bf16.mxu0 0
        %362 = vmatpush1.bf16.msra.mxu0 0
        %363 = vmatprep.subr.bf16.mxu0 0
        %364 = vmatpush1.bf16.msra.mxu0 0
        %365 = vmatprep.subr.bf16.mxu0 0
        %366 = vmatpush1.bf16.msra.mxu0 0
        %367 = vmatprep.subr.bf16.mxu0 0
        %368 = vmatpush1.bf16.msra.mxu0 0
        %369 = vmatprep.subr.bf16.mxu0 0
        %370 = vmatpush1.bf16.msra.mxu0 0
        %371 = vmatprep.subr.bf16.mxu0 0
        %372 = vmatpush1.bf16.msra.mxu0 0
        %373 = vmatprep.subr.bf16.mxu0 0
        %374 = vmatpush1.bf16.msra.mxu0 0
        %375 = vmatprep.mubr.bf16.mxu0 0
        %376 = vmatmul.mubr.bf16.gmra.mrb[0].mxu0 %v271
        %v377 = vpop.f32.mrb[0].mxu0
        %v378 = vadd.f32 %v293, %v377
        %v379 = vpop.f32.mrb[0].mxu0
        %v380 = vpop.f32.mrb[0].mxu0
        %v381 = vpop.f32.mrb[0].mxu0
        %382 = vdwg.mxu0
        %v383 = vmul.f32 %v378, 0.5
        %v384 = vmul.f32 %v378, 0.70710677
        %v385 = verf.f32.pop %v384
        %v386 = vadd.f32 %v385, 1.0
        %v387 = vmul.f32 %v383, %v386
        %v388 = vpack.c.bf16 %v387, %v387
        %v389 = vld [vmem:[#allocation7] sm:$0xf]
        %v390 = vld [vmem:[#allocation7 + $0x4] sm:$0xf]
        %v391 = vld [vmem:[#allocation7 + $0x8] sm:$0xf]
        %v392 = vld [vmem:[#allocation7 + $0xc] sm:$0xf]
        %v393 = vld [vmem:[#allocation7 + $0x10] sm:$0xf]
        %v394 = vld [vmem:[#allocation7 + $0x14] sm:$0xf]
        %v395 = vld [vmem:[#allocation7 + $0x18] sm:$0xf]
        %v396 = vld [vmem:[#allocation7 + $0x1c] sm:$0xf]
        %v397 = vld [vmem:[#allocation7 + $0x20] sm:$0xf]
        %v398 = vld [vmem:[#allocation7 + $0x24] sm:$0xf]
        %v399 = vld [vmem:[#allocation7 + $0x28] sm:$0xf]
        %v400 = vld [vmem:[#allocation7 + $0x2c] sm:$0xf]
        %v401 = vld [vmem:[#allocation7 + $0x30] sm:$0xf]
        %v402 = vld [vmem:[#allocation7 + $0x34] sm:$0xf]
        %v403 = vld [vmem:[#allocation7 + $0x38] sm:$0xf]
        %v404 = vld [vmem:[#allocation7 + $0x3c] sm:$0xf]
        %v405 = vld [vmem:[%s4] sm:$0x1]
        %v407 = vlaneseq
        %v408 = vshrl.u32 %v407, 7
        %v409 = vsub.s32 0, %v408
        %v410 = vrot.slane %v405, %v409
        %v428 = vunpack.c.l.b16 %v389
        %v429 = vunpack.c.l.b16 %v390
        %v430 = vunpack.c.l.b16 %v391
        %v431 = vunpack.c.l.b16 %v392
        %v432 = vunpack.c.l.b16 %v393
        %v433 = vunpack.c.l.b16 %v394
        %v434 = vunpack.c.l.b16 %v395
        %v435 = vunpack.c.l.b16 %v396
        %v436 = vunpack.c.l.b16 %v397
        %v437 = vunpack.c.l.b16 %v398
        %v438 = vunpack.c.l.b16 %v399
        %v439 = vunpack.c.l.b16 %v400
        %v440 = vunpack.c.l.b16 %v401
        %v441 = vunpack.c.l.b16 %v402
        %v442 = vunpack.c.l.b16 %v403
        %v443 = vunpack.c.l.b16 %v404
        %v444 = vpack.c.b16 %v429, %v428
        %v445 = vpack.c.b16 %v431, %v430
        %v446 = vpack.c.b16 %v433, %v432
        %v447 = vpack.c.b16 %v435, %v434
        %v448 = vpack.c.b16 %v437, %v436
        %v449 = vpack.c.b16 %v439, %v438
        %v450 = vpack.c.b16 %v441, %v440
        %v451 = vpack.c.b16 %v443, %v442
        %460 = vmatprep.subr.bf16.mxu0 0
        %461 = vmatpush1.bf16.msra.mxu0 %v444
        %462 = vmatprep.subr.bf16.mxu0 0
        %463 = vmatpush1.bf16.msra.mxu0 %v445
        %464 = vmatprep.subr.bf16.mxu0 0
        %465 = vmatpush1.bf16.msra.mxu0 %v446
        %466 = vmatprep.subr.bf16.mxu0 0
        %467 = vmatpush1.bf16.msra.mxu0 %v447
        %468 = vmatprep.subr.bf16.mxu0 0
        %469 = vmatpush1.bf16.msra.mxu0 %v448
        %470 = vmatprep.subr.bf16.mxu0 0
        %471 = vmatpush1.bf16.msra.mxu0 %v449
        %472 = vmatprep.subr.bf16.mxu0 0
        %473 = vmatpush1.bf16.msra.mxu0 %v450
        %474 = vmatprep.subr.bf16.mxu0 0
        %475 = vmatpush1.bf16.msra.mxu0 %v451
        %476 = vmatprep.subr.bf16.mxu0 0
        %477 = vmatpush1.bf16.msra.mxu0 0
        %478 = vmatprep.subr.bf16.mxu0 0
        %479 = vmatpush1.bf16.msra.mxu0 0
        %480 = vmatprep.subr.bf16.mxu0 0
        %481 = vmatpush1.bf16.msra.mxu0 0
        %482 = vmatprep.subr.bf16.mxu0 0
        %483 = vmatpush1.bf16.msra.mxu0 0
        %484 = vmatprep.subr.bf16.mxu0 0
        %485 = vmatpush1.bf16.msra.mxu0 0
        %486 = vmatprep.subr.bf16.mxu0 0
        %487 = vmatpush1.bf16.msra.mxu0 0
        %488 = vmatprep.subr.bf16.mxu0 0
        %489 = vmatpush1.bf16.msra.mxu0 0
        %490 = vmatprep.subr.bf16.mxu0 0
        %491 = vmatpush1.bf16.msra.mxu0 0
        %492 = vmatprep.mubr.bf16.mxu0 0
        %493 = vmatmul.mubr.bf16.gmra.mrb[0].mxu0 %v388
        %v494 = vpop.f32.mrb[0].mxu0
        %v495 = vadd.f32 %v410, %v494
        %v496 = vpop.f32.mrb[0].mxu0
        %v497 = vpop.f32.mrb[0].mxu0
        %v498 = vpop.f32.mrb[0].mxu0
        %499 = vdwg.mxu0
        %500 = vst [vmem:[%s268] sm:$0xff] %v495
        %s501 = sand.u32 %s141, 1
        %s502 = scalar_lea.sflag [#allocation4], %s501
        %s503 = sand.u32 %s141, 1
        %s504 = smul.addr %s503, 8
        %s505 = scalar_lea.vmem [#allocation8], %s504
        // Predicated region
        $region53: #{tpu_custom_call.1} parent=39 // pred_check
          %p506 = pneg %p151
        $region54: #{tpu_custom_call.1} parent=39 // pred_check_branch
          %508 = sbr.rel (%p506) target = $region56
        $region55: #{tpu_custom_call.1} parent=39 // pred_region
          %s510 = ssub.s32 128, 128
          %511 = vsyncadd %s502, %s510
          %s512 = smul.addr %s23, 128
          %s513 = scalar_lea.hbm %s5, %s512
          %s515 = sshll.u32 %s505, 4
          %s516 = int_to_ptr.vmem [resolvable:$true] %s515
          %518 = dma.vmem_to_hbm [thread:$0]  %s516, 128, %s513, %s502
        $region56: #{tpu_custom_call.1} parent=39 // pred_fallthru
          _
      $region40: #{tpu_custom_call.1} parent=5 // pred_fallthru
        _
      %p519 = scmp.le.s32.totalorder 2, %s18
      // Predicated region
      $region57: #{tpu_custom_call.1} parent=5 // pred_check
        %p520 = pneg %p519
      $region58: #{tpu_custom_call.1} parent=5 // pred_check_branch
        %522 = sbr.rel (%p520) target = $region60
      $region59: #{tpu_custom_call.1} parent=5 // pred_region
        %s523 = ssub.s32 %s18, 2
        // Predicated region
        $region61: #{tpu_custom_call.1} parent=59 // pred_check
          %p524 = pneg %p157
        $region62: #{tpu_custom_call.1} parent=59 // pred_check_branch
          %526 = sbr.rel (%p524) target = $region64
        $region63: #{tpu_custom_call.1} parent=59 // pred_region
          %s527 = sand.u32 %s142, 1
          %s528 = scalar_lea.sflag [#allocation4], %s527
          %s529 = sand.u32 %s142, 1
          %s530 = smul.addr %s529, 8
          %s531 = scalar_lea.vmem [#allocation8], %s530
          %532 = dma.done %s528, 128
        $region64: #{tpu_custom_call.1} parent=59 // pred_fallthru
          _
      $region60: #{tpu_custom_call.1} parent=5 // pred_fallthru
        _
    $region6: #{tpu_custom_call.1} parent=1 // loop_footer
      %s22 = sadd.s32 1, %s18
    $region7: #{tpu_custom_call.1} parent=1 // loop_footer_branch
      %17 = sbr.rel target = $region3
    $region8: #{tpu_custom_call.1} parent=1 // loop_exit
      _
    %533 = vsyncpa [#allocation3], 1
    %s534 = scalar_lea.sflag [#allocation3], 1
    %535 = vsyncpa %s534, 1
    %536 = vsyncpa [#allocation6], 1
    %537 = vsyncpa [#allocation4], 1
    %s538 = scalar_lea.sflag [#allocation4], 1
    %539 = vsyncpa %s538, 1

</llo_original>
